<compile_context>
chip_gen: v5e
topology: v5e:2x2
jax: 0.10.0
libtpu: 0.0.40
codegen_flags: <defaults>
</compile_context>

<pallas_src>
import functools

import jax
import jax.numpy as jnp
from jax.experimental import pallas as pl
from jax.experimental.pallas import tpu as pltpu


def _mlp_kernel(x_ref, w1_ref, b1_ref, w2_ref, b2_ref, w3_ref, b3_ref, o_ref):
    # fc1 + ReLU (matmul operands may be bf16; accumulate + bias/ReLU in f32)
    h1 = jnp.dot(x_ref[...], w1_ref[...], preferred_element_type=jnp.float32)
    h1 = jnp.maximum(h1 + b1_ref[...], 0.0)
    # fc2 + ReLU
    h2 = jnp.dot(h1.astype(w2_ref.dtype), w2_ref[...],
                 preferred_element_type=jnp.float32)
    h2 = jnp.maximum(h2 + b2_ref[...], 0.0)
    # fc4 (logits, no activation)
    o_ref[...] = (jnp.dot(h2.astype(w3_ref.dtype), w3_ref[...],
                          preferred_element_type=jnp.float32)
                  + b3_ref[...])


def pack_params(params, *, compute_dtype=jnp.float32):
    """One-time packing of PyTorch-convention params for the Pallas kernel.

    params: w1 (H1, D), b1 (H1,), w2 (H1, H1), b2 (H1,), w3 (C, H1), b3 (C,).
    Returns a dict of kernel-ready arrays:
      w* transposed to (in, out) in `compute_dtype` (bf16 recommended on
      v6e/v7x), class dim padded to a multiple of 128 lanes, biases as
      (1, features) f32 rows.
    """
    hidden = params["w1"].shape[0]
    num_classes = params["w3"].shape[0]
    n_pad = max(128, pl.cdiv(num_classes, 128) * 128)

    w3 = jnp.zeros((hidden, n_pad), compute_dtype)
    w3 = w3.at[:, :num_classes].set(params["w3"].T.astype(compute_dtype))
    b3 = jnp.zeros((1, n_pad), jnp.float32)
    b3 = b3.at[:, :num_classes].set(params["b3"].astype(jnp.float32))

    return {
        "w1": params["w1"].T.astype(compute_dtype),          # (D, hidden)
        "b1": params["b1"].reshape(1, hidden).astype(jnp.float32),
        "w2": params["w2"].T.astype(compute_dtype),          # (hidden, hidden)
        "b2": params["b2"].reshape(1, hidden).astype(jnp.float32),
        "w3": w3,                                            # (hidden, n_pad)
        "b3": b3,                                            # (1, n_pad)
    }


def _round_up(n, m):
    return ((n + m - 1) // m) * m


def nn_mnist_forward(x, packed, *, batch_tile=None):
    """Forward pass of NN_MNIST as a single fused Pallas TPU kernel.

    x: (B, C, H, W) or (B, D).
    packed: output of pack_params().
    Returns (B, n_pad) logits with the class dim padded to 128 lanes; slice
    [:, :num_classes] at the final consumer.
    """
    if x.ndim > 2:
        x = x.reshape(x.shape[0], -1)            # == x.view(x.size(0), -1)
    B, D = x.shape
    compute_dtype = packed["w1"].dtype
    x = x.astype(compute_dtype)

    hidden = packed["w1"].shape[1]
    n_pad = packed["w3"].shape[1]

    # Batch tiling: whole batch in one grid step when it fits comfortably
    # (no per-step pipeline overhead, full MXU rows); otherwise 512-row tiles.
    # For v7x megacore, large batches naturally yield >= 2 "parallel" tiles.
    if batch_tile is None:
        tb = _round_up(B, 8) if B <= 512 else 512
    else:
        tb = _round_up(min(batch_tile, B), 8)
    n_tiles = pl.cdiv(B, tb)
    B_pad = n_tiles * tb
    if B_pad != B:
        x = jnp.zeros((B_pad, D), x.dtype).at[:B, :].set(x)

    out = pl.pallas_call(
        _mlp_kernel,
        out_shape=jax.ShapeDtypeStruct((B_pad, n_pad), jnp.float32),
        grid_spec=pltpu.PrefetchScalarGridSpec(
            num_scalar_prefetch=0,
            grid=(n_tiles,),
            in_specs=[
                pl.BlockSpec((tb, D), lambda i: (i, 0)),           # x tile
                pl.BlockSpec((D, hidden), lambda i: (0, 0)),       # w1 (full)
                pl.BlockSpec((1, hidden), lambda i: (0, 0)),       # b1
                pl.BlockSpec((hidden, hidden), lambda i: (0, 0)),  # w2 (full)
                pl.BlockSpec((1, hidden), lambda i: (0, 0)),       # b2
                pl.BlockSpec((hidden, n_pad), lambda i: (0, 0)),   # w3 (padded)
                pl.BlockSpec((1, n_pad), lambda i: (0, 0)),        # b3
            ],
            out_specs=pl.BlockSpec((tb, n_pad), lambda i: (i, 0)),
        ),
        compiler_params=pltpu.CompilerParams(
            dimension_semantics=("parallel",),
        ),
    )(x, packed["w1"], packed["b1"], packed["w2"], packed["b2"],
      packed["w3"], packed["b3"])

    # Trim only padded batch rows (no-op when B_pad == B); keep lane-dense
    # padded class dim — slice classes at the final consumer.
    return out[:B]


def init_params(key, input_dim, hidden_dim, num_classes):
    """Deterministic init with PyTorch Linear default shapes (out, in)."""
    k1, k2, k3, k4, k5, k6 = jax.random.split(key, 6)

    def u(k, shape, fan_in):
        bound = 1.0 / jnp.sqrt(fan_in)
        return jax.random.uniform(k, shape, jnp.float32, -bound, bound)

    return {
        "w1": u(k1, (hidden_dim, input_dim), input_dim),
        "b1": u(k2, (hidden_dim,), input_dim),
        "w2": u(k3, (hidden_dim, hidden_dim), hidden_dim),
        "b2": u(k4, (hidden_dim,), hidden_dim),
        "w3": u(k5, (num_classes, hidden_dim), hidden_dim),
        "b3": u(k6, (num_classes,), hidden_dim),
    }


def _reference(x, p):
    if x.ndim > 2:
        x = x.reshape(x.shape[0], -1)
    h1 = jnp.maximum(x @ p["w1"].T + p["b1"], 0.0)
    h2 = jnp.maximum(h1 @ p["w2"].T + p["b2"], 0.0)
    return h2 @ p["w3"].T + p["b3"]


if __name__ == "__main__":
    # Small MNIST-like shapes: batch=8, 1x16x16 images -> input_dim=256,
    # hidden_dim=256, num_classes=10.
    B, C, H, W = 8, 1, 16, 16
    input_dim, hidden_dim, num_classes = C * H * W, 256, 10

    key = jax.random.PRNGKey(0)
    kx, kp = jax.random.split(key)
    x = jax.random.normal(kx, (B, C, H, W), jnp.float32)
    params = init_params(kp, input_dim, hidden_dim, num_classes)

    # One-time parameter packing (transpose / pad) hoisted out of the forward.
    # For v6e/v7x inference, pass compute_dtype=jnp.bfloat16 here.
    packed = pack_params(params, compute_dtype=jnp.float32)

    fwd = jax.jit(nn_mnist_forward)
    logits_padded = fwd(x, packed)
    logits_padded = jax.block_until_ready(logits_padded)

    logits = logits_padded[:, :num_classes]   # trim only at the final consumer
    ref = _reference(x, params)
    assert logits.shape == (B, num_classes)
    assert jnp.allclose(logits, ref, atol=1e-4, rtol=1e-4), "mismatch vs reference"
    print("KERNEL_OK")
</pallas_src>

<mosaic_0001>
module attributes {stable_mosaic.version = 11 : i64} {
  func.func @_mlp_kernel(%arg0: i32, %arg1: memref<8x256xf32, #tpu.memory_space<vmem>>, %arg2: memref<256x256xf32, #tpu.memory_space<vmem>>, %arg3: memref<1x256xf32, #tpu.memory_space<vmem>>, %arg4: memref<256x256xf32, #tpu.memory_space<vmem>>, %arg5: memref<1x256xf32, #tpu.memory_space<vmem>>, %arg6: memref<256x128xf32, #tpu.memory_space<vmem>>, %arg7: memref<1x128xf32, #tpu.memory_space<vmem>>, %arg8: memref<8x128xf32, #tpu.memory_space<vmem>>) attributes {dimension_semantics = [#tpu.dimension_semantics<parallel>], iteration_bounds = array<i64: 1>, scalar_prefetch = 0 : i64, scratch_operands = 0 : i64, tpu.core_type = #tpu.core_type<tc>, window_params = [{transform_indices = @transform_0, window_bounds = array<i64: 8, 256>}, {pipeline_mode = #tpu.pipeline_mode<synchronous>, transform_indices = @transform_1, window_bounds = array<i64: 256, 256>}, {pipeline_mode = #tpu.pipeline_mode<synchronous>, transform_indices = @transform_2, window_bounds = array<i64: 1, 256>}, {pipeline_mode = #tpu.pipeline_mode<synchronous>, transform_indices = @transform_3, window_bounds = array<i64: 256, 256>}, {pipeline_mode = #tpu.pipeline_mode<synchronous>, transform_indices = @transform_4, window_bounds = array<i64: 1, 256>}, {pipeline_mode = #tpu.pipeline_mode<synchronous>, transform_indices = @transform_5, window_bounds = array<i64: 256, 128>}, {pipeline_mode = #tpu.pipeline_mode<synchronous>, transform_indices = @transform_6, window_bounds = array<i64: 1, 128>}, {transform_indices = @transform_7, window_bounds = array<i64: 8, 128>}]} {
    %c0 = arith.constant 0 : index
    %c0_0 = arith.constant 0 : index
    %0 = vector.load %arg1[%c0, %c0_0] : memref<8x256xf32, #tpu.memory_space<vmem>>, vector<8x256xf32>
    %c0_1 = arith.constant 0 : index
    %c0_2 = arith.constant 0 : index
    %1 = vector.load %arg2[%c0_1, %c0_2] : memref<256x256xf32, #tpu.memory_space<vmem>>, vector<256x256xf32>
    %cst = arith.constant dense<0.000000e+00> : vector<8x256xf32>
    %2 = tpu.matmul %0, %1, %cst {dimension_numbers = #tpu.dot_dimension_numbers<[1], [0], [0], [1], [0, 0, 1, 1], [], []>} : vector<8x256xf32>, vector<256x256xf32>, vector<8x256xf32> -> vector<8x256xf32>
    %c0_3 = arith.constant 0 : index
    %c0_4 = arith.constant 0 : index
    %3 = vector.load %arg3[%c0_3, %c0_4] : memref<1x256xf32, #tpu.memory_space<vmem>>, vector<1x256xf32>
    %4 = vector.broadcast %3 : vector<1x256xf32> to vector<8x256xf32>
    %5 = arith.addf %2, %4 : vector<8x256xf32>
    %cst_5 = arith.constant 0.000000e+00 : f32
    %6 = vector.broadcast %cst_5 : f32 to vector<8x256xf32>
    %7 = arith.maximumf %5, %6 : vector<8x256xf32>
    %c0_6 = arith.constant 0 : index
    %c0_7 = arith.constant 0 : index
    %8 = vector.load %arg4[%c0_6, %c0_7] : memref<256x256xf32, #tpu.memory_space<vmem>>, vector<256x256xf32>
    %cst_8 = arith.constant dense<0.000000e+00> : vector<8x256xf32>
    %9 = tpu.matmul %7, %8, %cst_8 {dimension_numbers = #tpu.dot_dimension_numbers<[1], [0], [0], [1], [0, 0, 1, 1], [], []>} : vector<8x256xf32>, vector<256x256xf32>, vector<8x256xf32> -> vector<8x256xf32>
    %c0_9 = arith.constant 0 : index
    %c0_10 = arith.constant 0 : index
    %10 = vector.load %arg5[%c0_9, %c0_10] : memref<1x256xf32, #tpu.memory_space<vmem>>, vector<1x256xf32>
    %11 = vector.broadcast %10 : vector<1x256xf32> to vector<8x256xf32>
    %12 = arith.addf %9, %11 : vector<8x256xf32>
    %cst_11 = arith.constant 0.000000e+00 : f32
    %13 = vector.broadcast %cst_11 : f32 to vector<8x256xf32>
    %14 = arith.maximumf %12, %13 : vector<8x256xf32>
    %c0_12 = arith.constant 0 : index
    %c0_13 = arith.constant 0 : index
    %15 = vector.load %arg6[%c0_12, %c0_13] : memref<256x128xf32, #tpu.memory_space<vmem>>, vector<256x128xf32>
    %cst_14 = arith.constant dense<0.000000e+00> : vector<8x128xf32>
    %16 = tpu.matmul %14, %15, %cst_14 {dimension_numbers = #tpu.dot_dimension_numbers<[1], [0], [0], [1], [0, 0, 1, 1], [], []>} : vector<8x256xf32>, vector<256x128xf32>, vector<8x128xf32> -> vector<8x128xf32>
    %c0_15 = arith.constant 0 : index
    %c0_16 = arith.constant 0 : index
    %17 = vector.load %arg7[%c0_15, %c0_16] : memref<1x128xf32, #tpu.memory_space<vmem>>, vector<1x128xf32>
    %18 = vector.broadcast %17 : vector<1x128xf32> to vector<8x128xf32>
    %19 = arith.addf %16, %18 : vector<8x128xf32>
    %c0_17 = arith.constant 0 : index
    %c0_18 = arith.constant 0 : index
    %20 = vector.load %arg8[%c0_17, %c0_18] : memref<8x128xf32, #tpu.memory_space<vmem>>, vector<8x128xf32>
    tpu.vector_store %arg8[%c0_17, %c0_18], %19 {strides = array<i32>} : memref<8x128xf32, #tpu.memory_space<vmem>>, vector<8x128xf32>,
    return
  }
  func.func @transform_0(%arg0: i32) -> (i32, i32) {
    %c0_i32 = arith.constant 0 : i32
    %c0_i32_0 = arith.constant 0 : i32
    return %arg0, %c0_i32 : i32, i32
  }
  func.func @transform_1(%arg0: i32) -> (i32, i32) {
    %c0_i32 = arith.constant 0 : i32
    %c0_i32_0 = arith.constant 0 : i32
    %c0_i32_1 = arith.constant 0 : i32
    return %c0_i32, %c0_i32_0 : i32, i32
  }
  func.func @transform_2(%arg0: i32) -> (i32, i32) {
    %c0_i32 = arith.constant 0 : i32
    %c0_i32_0 = arith.constant 0 : i32
    %c0_i32_1 = arith.constant 0 : i32
    return %c0_i32, %c0_i32_0 : i32, i32
  }
  func.func @transform_3(%arg0: i32) -> (i32, i32) {
    %c0_i32 = arith.constant 0 : i32
    %c0_i32_0 = arith.constant 0 : i32
    %c0_i32_1 = arith.constant 0 : i32
    return %c0_i32, %c0_i32_0 : i32, i32
  }
  func.func @transform_4(%arg0: i32) -> (i32, i32) {
    %c0_i32 = arith.constant 0 : i32
    %c0_i32_0 = arith.constant 0 : i32
    %c0_i32_1 = arith.constant 0 : i32
    return %c0_i32, %c0_i32_0 : i32, i32
  }
  func.func @transform_5(%arg0: i32) -> (i32, i32) {
    %c0_i32 = arith.constant 0 : i32
    %c0_i32_0 = arith.constant 0 : i32
    %c0_i32_1 = arith.constant 0 : i32
    return %c0_i32, %c0_i32_0 : i32, i32
  }
  func.func @transform_6(%arg0: i32) -> (i32, i32) {
    %c0_i32 = arith.constant 0 : i32
    %c0_i32_0 = arith.constant 0 : i32
    %c0_i32_1 = arith.constant 0 : i32
    return %c0_i32, %c0_i32_0 : i32, i32
  }
  func.func @transform_7(%arg0: i32) -> (i32, i32) {
    %c0_i32 = arith.constant 0 : i32
    %c0_i32_0 = arith.constant 0 : i32
    return %arg0, %c0_i32 : i32, i32
  }
}

</mosaic_0001>

<llo_original>
// kernel: nn_mnist_forward.1
$region0: #{nn_mnist_forward.1}
  #allocation0 [shape = 'u32[]', space=smem, size = 0x4, offset = 0x4, fixed_abs, tag = 'smem constant byte address 0x4 - core index']
  #allocation1 [shape = 'u32[72,128]{1,0:T(1,128)}', space=vmem, size = 0x9000, scoped, tag = 'internal scratch']
  %s0 = inlined_call_operand.vmem [shape: f32[8,256], index: 0, kind: input, shape index: {}]
  %s1 = inlined_call_operand.hbm [shape: f32[256,256], index: 1, kind: input, shape index: {}]
  %s2 = inlined_call_operand.vmem [shape: f32[1,256], index: 2, kind: input, shape index: {}]
  %s3 = inlined_call_operand.hbm [shape: f32[256,256], index: 3, kind: input, shape index: {}]
  %s4 = inlined_call_operand.vmem [shape: f32[1,256], index: 4, kind: input, shape index: {}]
  %s5 = inlined_call_operand.hbm [shape: f32[256,128], index: 5, kind: input, shape index: {}]
  %s6 = inlined_call_operand.vmem [shape: f32[1,128], index: 6, kind: input, shape index: {}]
  %s7 = inlined_call_operand.hbm [shape: f32[8,128], index: 7, kind: output, shape index: {}]
  %s8 = sld [smem:[#allocation0]]
  $region50: #{nn_mnist_forward.1} parent=0
    _
  %s10 = ssub.s32 1, %s8
  %s11 = scalar_select 0, %s10, %s8
  $region1: #{nn_mnist_forward.1} parent=0
    #allocation2 [shape = 'u8[262144]{0}', space=vmem, size = 0x40000, scoped, tag = 'input window, operand 1, single buffered']
    #allocation3 [shape = 's32[1]{0}', space=sflag, size = 0x4, scoped, tag = 'scoped memory for nn_mnist_forward.1']
    #allocation4 [shape = 's32[1]{0}', space=sflag, size = 0x4, scoped, tag = 'scoped memory for nn_mnist_forward.1']
    #allocation5 [shape = 'u8[262144]{0}', space=vmem, size = 0x40000, scoped, tag = 'input window, operand 3, single buffered']
    #allocation6 [shape = 's32[1]{0}', space=sflag, size = 0x4, scoped, tag = 'scoped memory for nn_mnist_forward.1']
    #allocation7 [shape = 'u8[131072]{0}', space=vmem, size = 0x20000, scoped, tag = 'input window, operand 5, single buffered']
    #allocation8 [shape = 'u8[4096]{0}', space=vmem, size = 0x1000, scoped, tag = 'output window, operand 0, single buffered']
    %12 = vsyncpa [#allocation3], 0
    %13 = vsyncpa [#allocation6], 0
    %14 = vsyncpa [#allocation4], 0
    // Predicated region
    $region2: #{nn_mnist_forward.1} parent=1 // pred_check
      _
    $region3: #{nn_mnist_forward.1} parent=1 // pred_check_branch
      %16 = sbr.rel (0) target = $region5
    $region4: #{nn_mnist_forward.1} parent=1 // pred_region
      _
    $region5: #{nn_mnist_forward.1} parent=1 // pred_fallthru
      _
    // Predicated region
    $region6: #{nn_mnist_forward.1} parent=1 // pred_check
      _
    $region7: #{nn_mnist_forward.1} parent=1 // pred_check_branch
      %18 = sbr.rel (0) target = $region9
    $region8: #{nn_mnist_forward.1} parent=1 // pred_region
      %20 = vsyncadd [#allocation3], 0
      %s21 = sshll.u32 %s1, 4
      %s22 = int_to_ptr.hbm [resolvable:$true] %s21
      %s23 = sshll.u32 [#allocation2], 4
      %s24 = int_to_ptr.vmem [resolvable:$true] %s23
      %29 = dma.hbm_to_vmem [thread:$0]  %s22, 8192, %s24, [#allocation3], 256, 256, 16
    $region9: #{nn_mnist_forward.1} parent=1 // pred_fallthru
      _
    // Predicated region
    $region10: #{nn_mnist_forward.1} parent=1 // pred_check
      _
    $region11: #{nn_mnist_forward.1} parent=1 // pred_check_branch
      %31 = sbr.rel (0) target = $region13
    $region12: #{nn_mnist_forward.1} parent=1 // pred_region
      _
    $region13: #{nn_mnist_forward.1} parent=1 // pred_fallthru
      _
    // Predicated region
    $region14: #{nn_mnist_forward.1} parent=1 // pred_check
      _
    $region15: #{nn_mnist_forward.1} parent=1 // pred_check_branch
      %33 = sbr.rel (0) target = $region17
    $region16: #{nn_mnist_forward.1} parent=1 // pred_region
      %35 = vsyncadd [#allocation6], 0
      %s36 = sshll.u32 %s3, 4
      %s37 = int_to_ptr.hbm [resolvable:$true] %s36
      %s38 = sshll.u32 [#allocation5], 4
      %s39 = int_to_ptr.vmem [resolvable:$true] %s38
      %44 = dma.hbm_to_vmem [thread:$0]  %s37, 8192, %s39, [#allocation6], 256, 256, 16
    $region17: #{nn_mnist_forward.1} parent=1 // pred_fallthru
      _
    // Predicated region
    $region18: #{nn_mnist_forward.1} parent=1 // pred_check
      _
    $region19: #{nn_mnist_forward.1} parent=1 // pred_check_branch
      %46 = sbr.rel (0) target = $region21
    $region20: #{nn_mnist_forward.1} parent=1 // pred_region
      _
    $region21: #{nn_mnist_forward.1} parent=1 // pred_fallthru
      _
    // Predicated region
    $region22: #{nn_mnist_forward.1} parent=1 // pred_check
      _
    $region23: #{nn_mnist_forward.1} parent=1 // pred_check_branch
      %48 = sbr.rel (0) target = $region25
    $region24: #{nn_mnist_forward.1} parent=1 // pred_region
      %50 = vsyncadd [#allocation6], 0
      %s51 = sshll.u32 %s5, 4
      %s52 = int_to_ptr.hbm [resolvable:$true] %s51
      %s53 = sshll.u32 [#allocation7], 4
      %s54 = int_to_ptr.vmem [resolvable:$true] %s53
      %59 = dma.hbm_to_vmem [thread:$0]  %s52, 4096, %s54, [#allocation6], 128, 128, 8
    $region25: #{nn_mnist_forward.1} parent=1 // pred_fallthru
      _
    // Predicated region
    $region26: #{nn_mnist_forward.1} parent=1 // pred_check
      _
    $region27: #{nn_mnist_forward.1} parent=1 // pred_check_branch
      %61 = sbr.rel (0) target = $region29
    $region28: #{nn_mnist_forward.1} parent=1 // pred_region
      _
    $region29: #{nn_mnist_forward.1} parent=1 // pred_fallthru
      _
    // Predicated region
    $region30: #{nn_mnist_forward.1} parent=1 // pred_check
      _
    $region31: #{nn_mnist_forward.1} parent=1 // pred_check_branch
      %63 = sbr.rel (0) target = $region33
    $region32: #{nn_mnist_forward.1} parent=1 // pred_region
      %65 = dma.done [#allocation3], 8192
    $region33: #{nn_mnist_forward.1} parent=1 // pred_fallthru
      _
    // Predicated region
    $region34: #{nn_mnist_forward.1} parent=1 // pred_check
      _
    $region35: #{nn_mnist_forward.1} parent=1 // pred_check_branch
      %67 = sbr.rel (0) target = $region37
    $region36: #{nn_mnist_forward.1} parent=1 // pred_region
      %69 = dma.done [#allocation6], 8192
    $region37: #{nn_mnist_forward.1} parent=1 // pred_fallthru
      _
    // Predicated region
    $region38: #{nn_mnist_forward.1} parent=1 // pred_check
      _
    $region39: #{nn_mnist_forward.1} parent=1 // pred_check_branch
      %71 = sbr.rel (0) target = $region41
    $region40: #{nn_mnist_forward.1} parent=1 // pred_region
      %73 = dma.done [#allocation6], 4096
    $region41: #{nn_mnist_forward.1} parent=1 // pred_fallthru
      _
    %v74 = vld [vmem:[%s0] sm:$0xff]
    %v75 = vld [vmem:[%s0 + $0x8] sm:$0xff]
    %v76 = vld [vmem:[#allocation2] sm:$0xff]
    %v77 = vld [vmem:[#allocation2 + $0x8] sm:$0xff]
    %v78 = vld [vmem:[#allocation2 + $0x10] sm:$0xff]
    %v79 = vld [vmem:[#allocation2 + $0x18] sm:$0xff]
    %v80 = vld [vmem:[#allocation2 + $0x20] sm:$0xff]
    %v81 = vld [vmem:[#allocation2 + $0x28] sm:$0xff]
    %v82 = vld [vmem:[#allocation2 + $0x30] sm:$0xff]
    %v83 = vld [vmem:[#allocation2 + $0x38] sm:$0xff]
    %v84 = vld [vmem:[#allocation2 + $0x40] sm:$0xff]
    %v85 = vld [vmem:[#allocation2 + $0x48] sm:$0xff]
    %v86 = vld [vmem:[#allocation2 + $0x50] sm:$0xff]
    %v87 = vld [vmem:[#allocation2 + $0x58] sm:$0xff]
    %v88 = vld [vmem:[#allocation2 + $0x60] sm:$0xff]
    %v89 = vld [vmem:[#allocation2 + $0x68] sm:$0xff]
    %v90 = vld [vmem:[#allocation2 + $0x70] sm:$0xff]
    %v91 = vld [vmem:[#allocation2 + $0x78] sm:$0xff]
    %v92 = vld [vmem:[#allocation2 + $0x80] sm:$0xff]
    %v93 = vld [vmem:[#allocation2 + $0x88] sm:$0xff]
    %v94 = vld [vmem:[#allocation2 + $0x90] sm:$0xff]
    %v95 = vld [vmem:[#allocation2 + $0x98] sm:$0xff]
    %v96 = vld [vmem:[#allocation2 + $0xa0] sm:$0xff]
    %v97 = vld [vmem:[#allocation2 + $0xa8] sm:$0xff]
    %v98 = vld [vmem:[#allocation2 + $0xb0] sm:$0xff]
    %v99 = vld [vmem:[#allocation2 + $0xb8] sm:$0xff]
    %v100 = vld [vmem:[#allocation2 + $0xc0] sm:$0xff]
    %v101 = vld [vmem:[#allocation2 + $0xc8] sm:$0xff]
    %v102 = vld [vmem:[#allocation2 + $0xd0] sm:$0xff]
    %v103 = vld [vmem:[#allocation2 + $0xd8] sm:$0xff]
    %v104 = vld [vmem:[#allocation2 + $0xe0] sm:$0xff]
    %v105 = vld [vmem:[#allocation2 + $0xe8] sm:$0xff]
    %v106 = vld [vmem:[#allocation2 + $0xf0] sm:$0xff]
    %v107 = vld [vmem:[#allocation2 + $0xf8] sm:$0xff]
    %v108 = vld [vmem:[#allocation2 + $0x100] sm:$0xff]
    %v109 = vld [vmem:[#allocation2 + $0x108] sm:$0xff]
    %v110 = vld [vmem:[#allocation2 + $0x110] sm:$0xff]
    %v111 = vld [vmem:[#allocation2 + $0x118] sm:$0xff]
    %v112 = vld [vmem:[#allocation2 + $0x120] sm:$0xff]
    %v113 = vld [vmem:[#allocation2 + $0x128] sm:$0xff]
    %v114 = vld [vmem:[#allocation2 + $0x130] sm:$0xff]
    %v115 = vld [vmem:[#allocation2 + $0x138] sm:$0xff]
    %v116 = vld [vmem:[#allocation2 + $0x140] sm:$0xff]
    %v117 = vld [vmem:[#allocation2 + $0x148] sm:$0xff]
    %v118 = vld [vmem:[#allocation2 + $0x150] sm:$0xff]
    %v119 = vld [vmem:[#allocation2 + $0x158] sm:$0xff]
    %v120 = vld [vmem:[#allocation2 + $0x160] sm:$0xff]
    %v121 = vld [vmem:[#allocation2 + $0x168] sm:$0xff]
    %v122 = vld [vmem:[#allocation2 + $0x170] sm:$0xff]
    %v123 = vld [vmem:[#allocation2 + $0x178] sm:$0xff]
    %v124 = vld [vmem:[#allocation2 + $0x180] sm:$0xff]
    %v125 = vld [vmem:[#allocation2 + $0x188] sm:$0xff]
    %v126 = vld [vmem:[#allocation2 + $0x190] sm:$0xff]
    %v127 = vld [vmem:[#allocation2 + $0x198] sm:$0xff]
    %v128 = vld [vmem:[#allocation2 + $0x1a0] sm:$0xff]
    %v129 = vld [vmem:[#allocation2 + $0x1a8] sm:$0xff]
    %v130 = vld [vmem:[#allocation2 + $0x1b0] sm:$0xff]
    %v131 = vld [vmem:[#allocation2 + $0x1b8] sm:$0xff]
    %v132 = vld [vmem:[#allocation2 + $0x1c0] sm:$0xff]
    %v133 = vld [vmem:[#allocation2 + $0x1c8] sm:$0xff]
    %v134 = vld [vmem:[#allocation2 + $0x1d0] sm:$0xff]
    %v135 = vld [vmem:[#allocation2 + $0x1d8] sm:$0xff]
    %v136 = vld [vmem:[#allocation2 + $0x1e0] sm:$0xff]
    %v137 = vld [vmem:[#allocation2 + $0x1e8] sm:$0xff]
    %v138 = vld [vmem:[#allocation2 + $0x1f0] sm:$0xff]
    %v139 = vld [vmem:[#allocation2 + $0x1f8] sm:$0xff]
    %v140 = vld [vmem:[%s2] sm:$0x3]
    %v142 = vperm.slane %v140, 0
    %v143 = vperm.slane %v140, 1
    %146 = vmatpush.msra.mxu0 %v106
    %147 = vmatpush.msra.mxu0 %v104
    %148 = vmatpush.msra.mxu0 %v102
    %149 = vmatpush.msra.mxu0 %v100
    %150 = vmatpush.msra.mxu0 %v98
    %151 = vmatpush.msra.mxu0 %v96
    %152 = vmatpush.msra.mxu0 %v94
    %153 = vmatpush.msra.mxu0 %v92
    %154 = vmatpush.msra.mxu0 %v90
    %155 = vmatpush.msra.mxu0 %v88
    %156 = vmatpush.msra.mxu0 %v86
    %157 = vmatpush.msra.mxu0 %v84
    %158 = vmatpush.msra.mxu0 %v82
    %159 = vmatpush.msra.mxu0 %v80
    %160 = vmatpush.msra.mxu0 %v78
    %161 = vmatpush.msra.mxu0 %v76
    %162 = vmatmul.f32.gmra.mxu0 %v74
    %v163 = vpop.f32.mrf.mxu0
    %v164 = vadd.f32 %v142, %v163
    %165 = vdwg.mxu0
    %166 = vmatpush.msra.mxu0 %v138
    %167 = vmatpush.msra.mxu0 %v136
    %168 = vmatpush.msra.mxu0 %v134
    %169 = vmatpush.msra.mxu0 %v132
    %170 = vmatpush.msra.mxu0 %v130
    %171 = vmatpush.msra.mxu0 %v128
    %172 = vmatpush.msra.mxu0 %v126
    %173 = vmatpush.msra.mxu0 %v124
    %174 = vmatpush.msra.mxu0 %v122
    %175 = vmatpush.msra.mxu0 %v120
    %176 = vmatpush.msra.mxu0 %v118
    %177 = vmatpush.msra.mxu0 %v116
    %178 = vmatpush.msra.mxu0 %v114
    %179 = vmatpush.msra.mxu0 %v112
    %180 = vmatpush.msra.mxu0 %v110
    %181 = vmatpush.msra.mxu0 %v108
    %182 = vmatmul.f32.gmra.mxu0 %v75
    %v183 = vpop.f32.mrf.mxu0
    %v184 = vadd.f32 %v164, %v183
    %185 = vdwg.mxu0
    %186 = vmatpush.msra.mxu0 %v107
    %187 = vmatpush.msra.mxu0 %v105
    %188 = vmatpush.msra.mxu0 %v103
    %189 = vmatpush.msra.mxu0 %v101
    %190 = vmatpush.msra.mxu0 %v99
    %191 = vmatpush.msra.mxu0 %v97
    %192 = vmatpush.msra.mxu0 %v95
    %193 = vmatpush.msra.mxu0 %v93
    %194 = vmatpush.msra.mxu0 %v91
    %195 = vmatpush.msra.mxu0 %v89
    %196 = vmatpush.msra.mxu0 %v87
    %197 = vmatpush.msra.mxu0 %v85
    %198 = vmatpush.msra.mxu0 %v83
    %199 = vmatpush.msra.mxu0 %v81
    %200 = vmatpush.msra.mxu0 %v79
    %201 = vmatpush.msra.mxu0 %v77
    %202 = vmatmul.f32.gmra.mxu0 %v74
    %v203 = vpop.f32.mrf.mxu0
    %v204 = vadd.f32 %v143, %v203
    %205 = vdwg.mxu0
    %206 = vmatpush.msra.mxu0 %v139
    %207 = vmatpush.msra.mxu0 %v137
    %208 = vmatpush.msra.mxu0 %v135
    %209 = vmatpush.msra.mxu0 %v133
    %210 = vmatpush.msra.mxu0 %v131
    %211 = vmatpush.msra.mxu0 %v129
    %212 = vmatpush.msra.mxu0 %v127
    %213 = vmatpush.msra.mxu0 %v125
    %214 = vmatpush.msra.mxu0 %v123
    %215 = vmatpush.msra.mxu0 %v121
    %216 = vmatpush.msra.mxu0 %v119
    %217 = vmatpush.msra.mxu0 %v117
    %218 = vmatpush.msra.mxu0 %v115
    %219 = vmatpush.msra.mxu0 %v113
    %220 = vmatpush.msra.mxu0 %v111
    %221 = vmatpush.msra.mxu0 %v109
    %222 = vmatmul.f32.gmra.mxu0 %v75
    %v223 = vpop.f32.mrf.mxu0
    %v224 = vadd.f32 %v204, %v223
    %225 = vdwg.mxu0
    %v226 = vmax.f32 %v184, 0.0
    %v227 = vmax.f32 %v224, 0.0
    %v228 = vld [vmem:[#allocation5] sm:$0xff]
    %v229 = vld [vmem:[#allocation5 + $0x8] sm:$0xff]
    %v230 = vld [vmem:[#allocation5 + $0x10] sm:$0xff]
    %v231 = vld [vmem:[#allocation5 + $0x18] sm:$0xff]
    %v232 = vld [vmem:[#allocation5 + $0x20] sm:$0xff]
    %v233 = vld [vmem:[#allocation5 + $0x28] sm:$0xff]
    %v234 = vld [vmem:[#allocation5 + $0x30] sm:$0xff]
    %v235 = vld [vmem:[#allocation5 + $0x38] sm:$0xff]
    %v236 = vld [vmem:[#allocation5 + $0x40] sm:$0xff]
    %v237 = vld [vmem:[#allocation5 + $0x48] sm:$0xff]
    %v238 = vld [vmem:[#allocation5 + $0x50] sm:$0xff]
    %v239 = vld [vmem:[#allocation5 + $0x58] sm:$0xff]
    %v240 = vld [vmem:[#allocation5 + $0x60] sm:$0xff]
    %v241 = vld [vmem:[#allocation5 + $0x68] sm:$0xff]
    %v242 = vld [vmem:[#allocation5 + $0x70] sm:$0xff]
    %v243 = vld [vmem:[#allocation5 + $0x78] sm:$0xff]
    %v244 = vld [vmem:[#allocation5 + $0x80] sm:$0xff]
    %v245 = vld [vmem:[#allocation5 + $0x88] sm:$0xff]
    %v246 = vld [vmem:[#allocation5 + $0x90] sm:$0xff]
    %v247 = vld [vmem:[#allocation5 + $0x98] sm:$0xff]
    %v248 = vld [vmem:[#allocation5 + $0xa0] sm:$0xff]
    %v249 = vld [vmem:[#allocation5 + $0xa8] sm:$0xff]
    %v250 = vld [vmem:[#allocation5 + $0xb0] sm:$0xff]
    %v251 = vld [vmem:[#allocation5 + $0xb8] sm:$0xff]
    %v252 = vld [vmem:[#allocation5 + $0xc0] sm:$0xff]
    %v253 = vld [vmem:[#allocation5 + $0xc8] sm:$0xff]
    %v254 = vld [vmem:[#allocation5 + $0xd0] sm:$0xff]
    %v255 = vld [vmem:[#allocation5 + $0xd8] sm:$0xff]
    %v256 = vld [vmem:[#allocation5 + $0xe0] sm:$0xff]
    %v257 = vld [vmem:[#allocation5 + $0xe8] sm:$0xff]
    %v258 = vld [vmem:[#allocation5 + $0xf0] sm:$0xff]
    %v259 = vld [vmem:[#allocation5 + $0xf8] sm:$0xff]
    %v260 = vld [vmem:[#allocation5 + $0x100] sm:$0xff]
    %v261 = vld [vmem:[#allocation5 + $0x108] sm:$0xff]
    %v262 = vld [vmem:[#allocation5 + $0x110] sm:$0xff]
    %v263 = vld [vmem:[#allocation5 + $0x118] sm:$0xff]
    %v264 = vld [vmem:[#allocation5 + $0x120] sm:$0xff]
    %v265 = vld [vmem:[#allocation5 + $0x128] sm:$0xff]
    %v266 = vld [vmem:[#allocation5 + $0x130] sm:$0xff]
    %v267 = vld [vmem:[#allocation5 + $0x138] sm:$0xff]
    %v268 = vld [vmem:[#allocation5 + $0x140] sm:$0xff]
    %v269 = vld [vmem:[#allocation5 + $0x148] sm:$0xff]
    %v270 = vld [vmem:[#allocation5 + $0x150] sm:$0xff]
    %v271 = vld [vmem:[#allocation5 + $0x158] sm:$0xff]
    %v272 = vld [vmem:[#allocation5 + $0x160] sm:$0xff]
    %v273 = vld [vmem:[#allocation5 + $0x168] sm:$0xff]
    %v274 = vld [vmem:[#allocation5 + $0x170] sm:$0xff]
    %v275 = vld [vmem:[#allocation5 + $0x178] sm:$0xff]
    %v276 = vld [vmem:[#allocation5 + $0x180] sm:$0xff]
    %v277 = vld [vmem:[#allocation5 + $0x188] sm:$0xff]
    %v278 = vld [vmem:[#allocation5 + $0x190] sm:$0xff]
    %v279 = vld [vmem:[#allocation5 + $0x198] sm:$0xff]
    %v280 = vld [vmem:[#allocation5 + $0x1a0] sm:$0xff]
    %v281 = vld [vmem:[#allocation5 + $0x1a8] sm:$0xff]
    %v282 = vld [vmem:[#allocation5 + $0x1b0] sm:$0xff]
    %v283 = vld [vmem:[#allocation5 + $0x1b8] sm:$0xff]
    %v284 = vld [vmem:[#allocation5 + $0x1c0] sm:$0xff]
    %v285 = vld [vmem:[#allocation5 + $0x1c8] sm:$0xff]
    %v286 = vld [vmem:[#allocation5 + $0x1d0] sm:$0xff]
    %v287 = vld [vmem:[#allocation5 + $0x1d8] sm:$0xff]
    %v288 = vld [vmem:[#allocation5 + $0x1e0] sm:$0xff]
    %v289 = vld [vmem:[#allocation5 + $0x1e8] sm:$0xff]
    %v290 = vld [vmem:[#allocation5 + $0x1f0] sm:$0xff]
    %v291 = vld [vmem:[#allocation5 + $0x1f8] sm:$0xff]
    %v292 = vld [vmem:[%s4] sm:$0x3]
    %v294 = vperm.slane %v292, 0
    %v295 = vperm.slane %v292, 1
    %298 = vmatpush.msra.mxu0 %v258
    %299 = vmatpush.msra.mxu0 %v256
    %300 = vmatpush.msra.mxu0 %v254
    %301 = vmatpush.msra.mxu0 %v252
    %302 = vmatpush.msra.mxu0 %v250
    %303 = vmatpush.msra.mxu0 %v248
    %304 = vmatpush.msra.mxu0 %v246
    %305 = vmatpush.msra.mxu0 %v244
    %306 = vmatpush.msra.mxu0 %v242
    %307 = vmatpush.msra.mxu0 %v240
    %308 = vmatpush.msra.mxu0 %v238
    %309 = vmatpush.msra.mxu0 %v236
    %310 = vmatpush.msra.mxu0 %v234
    %311 = vmatpush.msra.mxu0 %v232
    %312 = vmatpush.msra.mxu0 %v230
    %313 = vmatpush.msra.mxu0 %v228
    %314 = vmatmul.f32.gmra.mxu0 %v226
    %v315 = vpop.f32.mrf.mxu0
    %v316 = vadd.f32 %v294, %v315
    %317 = vdwg.mxu0
    %318 = vmatpush.msra.mxu0 %v290
    %319 = vmatpush.msra.mxu0 %v288
    %320 = vmatpush.msra.mxu0 %v286
    %321 = vmatpush.msra.mxu0 %v284
    %322 = vmatpush.msra.mxu0 %v282
    %323 = vmatpush.msra.mxu0 %v280
    %324 = vmatpush.msra.mxu0 %v278
    %325 = vmatpush.msra.mxu0 %v276
    %326 = vmatpush.msra.mxu0 %v274
    %327 = vmatpush.msra.mxu0 %v272
    %328 = vmatpush.msra.mxu0 %v270
    %329 = vmatpush.msra.mxu0 %v268
    %330 = vmatpush.msra.mxu0 %v266
    %331 = vmatpush.msra.mxu0 %v264
    %332 = vmatpush.msra.mxu0 %v262
    %333 = vmatpush.msra.mxu0 %v260
    %334 = vmatmul.f32.gmra.mxu0 %v227
    %v335 = vpop.f32.mrf.mxu0
    %v336 = vadd.f32 %v316, %v335
    %337 = vdwg.mxu0
    %338 = vmatpush.msra.mxu0 %v259
    %339 = vmatpush.msra.mxu0 %v257
    %340 = vmatpush.msra.mxu0 %v255
    %341 = vmatpush.msra.mxu0 %v253
    %342 = vmatpush.msra.mxu0 %v251
    %343 = vmatpush.msra.mxu0 %v249
    %344 = vmatpush.msra.mxu0 %v247
    %345 = vmatpush.msra.mxu0 %v245
    %346 = vmatpush.msra.mxu0 %v243
    %347 = vmatpush.msra.mxu0 %v241
    %348 = vmatpush.msra.mxu0 %v239
    %349 = vmatpush.msra.mxu0 %v237
    %350 = vmatpush.msra.mxu0 %v235
    %351 = vmatpush.msra.mxu0 %v233
    %352 = vmatpush.msra.mxu0 %v231
    %353 = vmatpush.msra.mxu0 %v229
    %354 = vmatmul.f32.gmra.mxu0 %v226
    %v355 = vpop.f32.mrf.mxu0
    %v356 = vadd.f32 %v295, %v355
    %357 = vdwg.mxu0
    %358 = vmatpush.msra.mxu0 %v291
    %359 = vmatpush.msra.mxu0 %v289
    %360 = vmatpush.msra.mxu0 %v287
    %361 = vmatpush.msra.mxu0 %v285
    %362 = vmatpush.msra.mxu0 %v283
    %363 = vmatpush.msra.mxu0 %v281
    %364 = vmatpush.msra.mxu0 %v279
    %365 = vmatpush.msra.mxu0 %v277
    %366 = vmatpush.msra.mxu0 %v275
    %367 = vmatpush.msra.mxu0 %v273
    %368 = vmatpush.msra.mxu0 %v271
    %369 = vmatpush.msra.mxu0 %v269
    %370 = vmatpush.msra.mxu0 %v267
    %371 = vmatpush.msra.mxu0 %v265
    %372 = vmatpush.msra.mxu0 %v263
    %373 = vmatpush.msra.mxu0 %v261
    %374 = vmatmul.f32.gmra.mxu0 %v227
    %v375 = vpop.f32.mrf.mxu0
    %v376 = vadd.f32 %v356, %v375
    %377 = vdwg.mxu0
    %v378 = vmax.f32 %v336, 0.0
    %v379 = vmax.f32 %v376, 0.0
    %v380 = vld [vmem:[#allocation7] sm:$0xff]
    %v381 = vld [vmem:[#allocation7 + $0x8] sm:$0xff]
    %v382 = vld [vmem:[#allocation7 + $0x10] sm:$0xff]
    %v383 = vld [vmem:[#allocation7 + $0x18] sm:$0xff]
    %v384 = vld [vmem:[#allocation7 + $0x20] sm:$0xff]
    %v385 = vld [vmem:[#allocation7 + $0x28] sm:$0xff]
    %v386 = vld [vmem:[#allocation7 + $0x30] sm:$0xff]
    %v387 = vld [vmem:[#allocation7 + $0x38] sm:$0xff]
    %v388 = vld [vmem:[#allocation7 + $0x40] sm:$0xff]
    %v389 = vld [vmem:[#allocation7 + $0x48] sm:$0xff]
    %v390 = vld [vmem:[#allocation7 + $0x50] sm:$0xff]
    %v391 = vld [vmem:[#allocation7 + $0x58] sm:$0xff]
    %v392 = vld [vmem:[#allocation7 + $0x60] sm:$0xff]
    %v393 = vld [vmem:[#allocation7 + $0x68] sm:$0xff]
    %v394 = vld [vmem:[#allocation7 + $0x70] sm:$0xff]
    %v395 = vld [vmem:[#allocation7 + $0x78] sm:$0xff]
    %v396 = vld [vmem:[#allocation7 + $0x80] sm:$0xff]
    %v397 = vld [vmem:[#allocation7 + $0x88] sm:$0xff]
    %v398 = vld [vmem:[#allocation7 + $0x90] sm:$0xff]
    %v399 = vld [vmem:[#allocation7 + $0x98] sm:$0xff]
    %v400 = vld [vmem:[#allocation7 + $0xa0] sm:$0xff]
    %v401 = vld [vmem:[#allocation7 + $0xa8] sm:$0xff]
    %v402 = vld [vmem:[#allocation7 + $0xb0] sm:$0xff]
    %v403 = vld [vmem:[#allocation7 + $0xb8] sm:$0xff]
    %v404 = vld [vmem:[#allocation7 + $0xc0] sm:$0xff]
    %v405 = vld [vmem:[#allocation7 + $0xc8] sm:$0xff]
    %v406 = vld [vmem:[#allocation7 + $0xd0] sm:$0xff]
    %v407 = vld [vmem:[#allocation7 + $0xd8] sm:$0xff]
    %v408 = vld [vmem:[#allocation7 + $0xe0] sm:$0xff]
    %v409 = vld [vmem:[#allocation7 + $0xe8] sm:$0xff]
    %v410 = vld [vmem:[#allocation7 + $0xf0] sm:$0xff]
    %v411 = vld [vmem:[#allocation7 + $0xf8] sm:$0xff]
    %v412 = vld [vmem:[%s6] sm:$0x1]
    %v414 = vperm.slane %v412, 0
    %416 = vmatpush.msra.mxu0 %v395
    %417 = vmatpush.msra.mxu0 %v394
    %418 = vmatpush.msra.mxu0 %v393
    %419 = vmatpush.msra.mxu0 %v392
    %420 = vmatpush.msra.mxu0 %v391
    %421 = vmatpush.msra.mxu0 %v390
    %422 = vmatpush.msra.mxu0 %v389
    %423 = vmatpush.msra.mxu0 %v388
    %424 = vmatpush.msra.mxu0 %v387
    %425 = vmatpush.msra.mxu0 %v386
    %426 = vmatpush.msra.mxu0 %v385
    %427 = vmatpush.msra.mxu0 %v384
    %428 = vmatpush.msra.mxu0 %v383
    %429 = vmatpush.msra.mxu0 %v382
    %430 = vmatpush.msra.mxu0 %v381
    %431 = vmatpush.msra.mxu0 %v380
    %432 = vmatmul.f32.gmra.mxu0 %v378
    %v433 = vpop.f32.mrf.mxu0
    %v434 = vadd.f32 %v414, %v433
    %435 = vdwg.mxu0
    %436 = vmatpush.msra.mxu0 %v411
    %437 = vmatpush.msra.mxu0 %v410
    %438 = vmatpush.msra.mxu0 %v409
    %439 = vmatpush.msra.mxu0 %v408
    %440 = vmatpush.msra.mxu0 %v407
    %441 = vmatpush.msra.mxu0 %v406
    %442 = vmatpush.msra.mxu0 %v405
    %443 = vmatpush.msra.mxu0 %v404
    %444 = vmatpush.msra.mxu0 %v403
    %445 = vmatpush.msra.mxu0 %v402
    %446 = vmatpush.msra.mxu0 %v401
    %447 = vmatpush.msra.mxu0 %v400
    %448 = vmatpush.msra.mxu0 %v399
    %449 = vmatpush.msra.mxu0 %v398
    %450 = vmatpush.msra.mxu0 %v397
    %451 = vmatpush.msra.mxu0 %v396
    %452 = vmatmul.f32.gmra.mxu0 %v379
    %v453 = vpop.f32.mrf.mxu0
    %v454 = vadd.f32 %v434, %v453
    %455 = vdwg.mxu0
    %456 = vst [vmem:[#allocation8] sm:$0xff] %v454
    // Predicated region
    $region42: #{nn_mnist_forward.1} parent=1 // pred_check
      _
    $region43: #{nn_mnist_forward.1} parent=1 // pred_check_branch
      %458 = sbr.rel (0) target = $region45
    $region44: #{nn_mnist_forward.1} parent=1 // pred_region
      %460 = vsyncadd [#allocation4], 0
      %s462 = sshll.u32 [#allocation8], 4
      %s463 = int_to_ptr.vmem [resolvable:$true] %s462
      %s464 = sshll.u32 %s7, 4
      %s465 = int_to_ptr.hbm [resolvable:$true] %s464
      %467 = dma.vmem_to_hbm [thread:$0]  %s463, 128, %s465, [#allocation4]
    $region45: #{nn_mnist_forward.1} parent=1 // pred_fallthru
      _
    // Predicated region
    $region46: #{nn_mnist_forward.1} parent=1 // pred_check
      _
    $region47: #{nn_mnist_forward.1} parent=1 // pred_check_branch
      %469 = sbr.rel (0) target = $region49
    $region48: #{nn_mnist_forward.1} parent=1 // pred_region
      %471 = dma.done [#allocation4], 128
    $region49: #{nn_mnist_forward.1} parent=1 // pred_fallthru
      _
    %472 = vsyncpa [#allocation3], 1
    %473 = vsyncpa [#allocation6], 1
    %474 = vsyncpa [#allocation4], 1

</llo_original>
